<compile_context>
chip_gen: v5e
topology: v5e:2x2
jax: 0.10.0
libtpu: 0.0.40
codegen_flags: <defaults>
</compile_context>

<pallas_src>
import jax
import jax.numpy as jnp
from jax import lax
from jax.experimental import pallas as pl
from jax.experimental.pallas import tpu as pltpu

NEGATIVE_SLOPE = 1.0  # from the module's constructor argument (Python constant)

IN_FEATURES = 25
OUT_FEATURES = 32     # module never specifies; pick a small hidden size
M = 20                # batch rows, matches x1 = torch.randn(20, 25)


def _linear_leaky_kernel(x_ref, w_ref, b_ref, o_ref):
    # Single-shot: MXU matmul + bias + (optional) leaky-relu epilogue on VPU.
    x = x_ref[...]                       # (M, K)
    w = w_ref[...]                       # (K, N)  -- canonical, pre-transposed
    acc = lax.dot_general(
        x, w,
        dimension_numbers=(((1,), (0,)), ((), ())),   # (M,K) x (K,N)
        preferred_element_type=jnp.float32)            # (M, N)
    acc = acc + b_ref[...]               # broadcast (1, N)
    if NEGATIVE_SLOPE != 1.0:            # slope == 1 -> exact identity; elide at trace time
        acc = jnp.where(acc > 0, acc, acc * NEGATIVE_SLOPE)
    o_ref[...] = acc.astype(o_ref.dtype)


def prepare_params(weight, bias):
    """One-time parameter prep: PyTorch (N, K) weight -> canonical (K, N)."""
    w_t = jnp.asarray(weight).T                      # (K, N)
    b = jnp.asarray(bias).reshape(1, -1)             # (1, N)
    return w_t, b


@jax.jit
def linear_leaky_relu(x, w_t, b):
    """x: (M, K) f32; w_t: (K, N) f32; b: (1, N) f32  ->  (M, N) f32."""
    m = x.shape[0]
    n = w_t.shape[1]
    # Whole problem (<30 KiB) is VMEM-resident: no grid, single invocation.
    return pl.pallas_call(
        _linear_leaky_kernel,
        out_shape=jax.ShapeDtypeStruct((m, n), jnp.float32),
        in_specs=[
            pl.BlockSpec(memory_space=pltpu.MemorySpace.VMEM),
            pl.BlockSpec(memory_space=pltpu.MemorySpace.VMEM),
            pl.BlockSpec(memory_space=pltpu.MemorySpace.VMEM),
        ],
        out_specs=pl.BlockSpec(memory_space=pltpu.MemorySpace.VMEM),
    )(x, w_t, b)


if __name__ == "__main__":
    key = jax.random.PRNGKey(0)
    kx, kw, kb = jax.random.split(key, 3)

    # Deterministic inputs / parameters (synthetic, not a checkpoint load).
    x1 = jax.random.normal(kx, (M, IN_FEATURES), dtype=jnp.float32)
    weight = jax.random.normal(kw, (OUT_FEATURES, IN_FEATURES), dtype=jnp.float32) * 0.1
    bias = jax.random.normal(kb, (OUT_FEATURES,), dtype=jnp.float32) * 0.1

    # One-time parameter prep (transpose to (K, N)) outside the hot path.
    w_t, b = prepare_params(weight, bias)

    out = linear_leaky_relu(x1, w_t, b)
    jax.block_until_ready(out)

    # Reference check in plain JAX against the original (PyTorch-layout) parameters.
    v1 = x1 @ weight.T + bias
    ref = jnp.where(v1 > 0, v1, v1 * NEGATIVE_SLOPE)
    assert out.shape == ref.shape, "shape mismatch vs reference"
    assert jnp.allclose(out, ref, atol=1e-4, rtol=1e-4), "mismatch vs reference"

    print("KERNEL_OK")
</pallas_src>

<mosaic_0001>
module attributes {stable_mosaic.version = 11 : i64} {
  func.func @_linear_leaky_kernel(%arg0: memref<20x25xf32, #tpu.memory_space<vmem>>, %arg1: memref<25x32xf32, #tpu.memory_space<vmem>>, %arg2: memref<1x32xf32, #tpu.memory_space<vmem>>, %arg3: memref<20x32xf32, #tpu.memory_space<vmem>>) attributes {dimension_semantics = [], scalar_prefetch = 0 : i64, scratch_operands = 0 : i64, tpu.core_type = #tpu.core_type<tc>} {
    %c0 = arith.constant 0 : index
    %c0_0 = arith.constant 0 : index
    %0 = vector.load %arg0[%c0, %c0_0] : memref<20x25xf32, #tpu.memory_space<vmem>>, vector<20x25xf32>
    %c0_1 = arith.constant 0 : index
    %c0_2 = arith.constant 0 : index
    %1 = vector.load %arg1[%c0_1, %c0_2] : memref<25x32xf32, #tpu.memory_space<vmem>>, vector<25x32xf32>
    %cst = arith.constant dense<0.000000e+00> : vector<20x32xf32>
    %2 = tpu.matmul %0, %1, %cst {dimension_numbers = #tpu.dot_dimension_numbers<[1], [0], [0], [1], [0, 0, 1, 1], [], []>} : vector<20x25xf32>, vector<25x32xf32>, vector<20x32xf32> -> vector<20x32xf32>
    %c0_3 = arith.constant 0 : index
    %c0_4 = arith.constant 0 : index
    %3 = vector.load %arg2[%c0_3, %c0_4] : memref<1x32xf32, #tpu.memory_space<vmem>>, vector<1x32xf32>
    %4 = vector.broadcast %3 : vector<1x32xf32> to vector<20x32xf32>
    %5 = arith.addf %2, %4 : vector<20x32xf32>
    %c0_5 = arith.constant 0 : index
    %c0_6 = arith.constant 0 : index
    %6 = vector.load %arg3[%c0_5, %c0_6] : memref<20x32xf32, #tpu.memory_space<vmem>>, vector<20x32xf32>
    tpu.vector_store %arg3[%c0_5, %c0_6], %5 {strides = array<i32>} : memref<20x32xf32, #tpu.memory_space<vmem>>, vector<20x32xf32>,
    return
  }
}

</mosaic_0001>

<llo_original>
// kernel: linear_leaky_relu.1
$region0: #{linear_leaky_relu.1}
  #allocation0 [shape = 'u32[]', space=smem, size = 0x4, offset = 0x4, fixed_abs, tag = 'smem constant byte address 0x4 - core index']
  #allocation1 [shape = 'u32[72,128]{1,0:T(1,128)}', space=vmem, size = 0x9000, scoped, tag = 'internal scratch']
  %s0 = inlined_call_operand.hbm [shape: f32[20,25], index: 0, kind: input, shape index: {}]
  %s1 = inlined_call_operand.hbm [shape: f32[25,32], index: 1, kind: input, shape index: {}]
  %s2 = inlined_call_operand.vmem [shape: f32[1,32], index: 2, kind: input, shape index: {}]
  %s3 = inlined_call_operand.hbm [shape: f32[20,32], index: 3, kind: output, shape index: {}]
  %s4 = sld [smem:[#allocation0]]
  $region30: #{linear_leaky_relu.1} parent=0
    _
  %s6 = ssub.s32 1, %s4
  %s7 = scalar_select 0, %s6, %s4
  $region1: #{linear_leaky_relu.1} parent=0
    #allocation2 [shape = 'u8[12288]{0}', space=vmem, size = 0x3000, scoped, tag = 'input window, operand 0, single buffered']
    #allocation3 [shape = 's32[1]{0}', space=sflag, size = 0x4, scoped, tag = 'scoped memory for linear_leaky_relu.1']
    #allocation4 [shape = 's32[1]{0}', space=sflag, size = 0x4, scoped, tag = 'scoped memory for linear_leaky_relu.1']
    #allocation5 [shape = 'u8[16384]{0}', space=vmem, size = 0x4000, scoped, tag = 'input window, operand 1, single buffered']
    #allocation6 [shape = 's32[1]{0}', space=sflag, size = 0x4, scoped, tag = 'scoped memory for linear_leaky_relu.1']
    #allocation7 [shape = 'u8[12288]{0}', space=vmem, size = 0x3000, scoped, tag = 'output window, operand 0, single buffered']
    %8 = vsyncpa [#allocation3], 0
    %9 = vsyncpa [#allocation6], 0
    %10 = vsyncpa [#allocation4], 0
    // Predicated region
    $region2: #{linear_leaky_relu.1} parent=1 // pred_check
      _
    $region3: #{linear_leaky_relu.1} parent=1 // pred_check_branch
      %12 = sbr.rel (0) target = $region5
    $region4: #{linear_leaky_relu.1} parent=1 // pred_region
      %14 = vsyncadd [#allocation3], 0
      %s15 = sshll.u32 %s0, 4
      %s16 = int_to_ptr.hbm [resolvable:$true] %s15
      %s17 = sshll.u32 [#allocation2], 4
      %s18 = int_to_ptr.vmem [resolvable:$true] %s17
      %23 = dma.hbm_to_vmem [thread:$0]  %s16, 384, %s18, [#allocation3], 128, 128, 8
    $region5: #{linear_leaky_relu.1} parent=1 // pred_fallthru
      _
    // Predicated region
    $region6: #{linear_leaky_relu.1} parent=1 // pred_check
      _
    $region7: #{linear_leaky_relu.1} parent=1 // pred_check_branch
      %25 = sbr.rel (0) target = $region9
    $region8: #{linear_leaky_relu.1} parent=1 // pred_region
      %27 = vsyncadd [#allocation6], 0
      %s28 = sshll.u32 %s1, 4
      %s29 = int_to_ptr.hbm [resolvable:$true] %s28
      %s30 = sshll.u32 [#allocation5], 4
      %s31 = int_to_ptr.vmem [resolvable:$true] %s30
      %36 = dma.hbm_to_vmem [thread:$0]  %s29, 512, %s31, [#allocation6], 128, 128, 8
    $region9: #{linear_leaky_relu.1} parent=1 // pred_fallthru
      _
    // Predicated region
    $region10: #{linear_leaky_relu.1} parent=1 // pred_check
      _
    $region11: #{linear_leaky_relu.1} parent=1 // pred_check_branch
      %38 = sbr.rel (0) target = $region13
    $region12: #{linear_leaky_relu.1} parent=1 // pred_region
      _
    $region13: #{linear_leaky_relu.1} parent=1 // pred_fallthru
      _
    // Predicated region
    $region14: #{linear_leaky_relu.1} parent=1 // pred_check
      _
    $region15: #{linear_leaky_relu.1} parent=1 // pred_check_branch
      %40 = sbr.rel (0) target = $region17
    $region16: #{linear_leaky_relu.1} parent=1 // pred_region
      %42 = dma.done [#allocation3], 384
    $region17: #{linear_leaky_relu.1} parent=1 // pred_fallthru
      _
    // Predicated region
    $region18: #{linear_leaky_relu.1} parent=1 // pred_check
      _
    $region19: #{linear_leaky_relu.1} parent=1 // pred_check_branch
      %44 = sbr.rel (0) target = $region21
    $region20: #{linear_leaky_relu.1} parent=1 // pred_region
      %46 = dma.done [#allocation6], 512
    $region21: #{linear_leaky_relu.1} parent=1 // pred_fallthru
      _
    %v47 = vld [vmem:[#allocation2] sm:$0xff]
    %v48 = vld [vmem:[#allocation2 + $0x8] sm:$0xff]
    %v49 = vld [vmem:[#allocation2 + $0x10] sm:$0xf]
    %v50 = vld [vmem:[#allocation5] sm:$0xff]
    %v51 = vld [vmem:[#allocation5 + $0x8] sm:$0xff]
    %v52 = vld [vmem:[#allocation5 + $0x10] sm:$0xff]
    %v53 = vld [vmem:[#allocation5 + $0x18] sm:$0x1]
    %v54 = vld [vmem:[%s2] sm:$0x1]
    %v56 = vperm.slane %v54, 0
    %vm58 = vcmask 203776
    %v60 = vsel %vm58, %v47, 0
    %v63 = vsel %vm58, %v48, 0
    %v66 = vsel %vm58, %v49, 0
    %vm68 = vcmask 1040384
    %v70 = vsel %vm68, %v53, 0
    %72 = vmatpush.msra.mxu0 0.0
    %73 = vmatpush.msra.mxu0 0.0
    %74 = vmatpush.msra.mxu0 0.0
    %75 = vmatpush.msra.mxu0 0.0
    %76 = vmatpush.msra.mxu0 0.0
    %77 = vmatpush.msra.mxu0 0.0
    %78 = vmatpush.msra.mxu0 0.0
    %79 = vmatpush.msra.mxu0 0.0
    %80 = vmatpush.msra.mxu0 0.0
    %81 = vmatpush.msra.mxu0 0.0
    %82 = vmatpush.msra.mxu0 0.0
    %83 = vmatpush.msra.mxu0 0.0
    %84 = vmatpush.msra.mxu0 %v70
    %85 = vmatpush.msra.mxu0 %v52
    %86 = vmatpush.msra.mxu0 %v51
    %87 = vmatpush.msra.mxu0 %v50
    %88 = vmatmul.f32.gmra.mxu0 %v60
    %v89 = vpop.f32.mrf.mxu0
    %v90 = vadd.f32 %v56, %v89
    %91 = vmatmul.f32.gmra.mxu0 %v63
    %v92 = vpop.f32.mrf.mxu0
    %v93 = vadd.f32 %v56, %v92
    %94 = vmatmul.f32.gmra.mxu0 %v66
    %v95 = vpop.f32.mrf.mxu0
    %v96 = vadd.f32 %v56, %v95
    %97 = vdwg.mxu0
    %vm98 = vcmask 261120
    %99 = vst.msk [vmem:[#allocation7] sm:$0xff] %vm98, %v90
    %100 = vst.msk [vmem:[#allocation7 + $0x8] sm:$0xff] %vm98, %v93
    %vm101 = vcmask 257024
    %102 = vst.msk [vmem:[#allocation7 + $0x10] sm:$0xf] %vm101, %v96
    // Predicated region
    $region22: #{linear_leaky_relu.1} parent=1 // pred_check
      _
    $region23: #{linear_leaky_relu.1} parent=1 // pred_check_branch
      %104 = sbr.rel (0) target = $region25
    $region24: #{linear_leaky_relu.1} parent=1 // pred_region
      %106 = vsyncadd [#allocation4], 0
      %s107 = sshll.u32 [#allocation7], 4
      %s108 = int_to_ptr.vmem [resolvable:$true] %s107
      %s109 = sshll.u32 %s3, 4
      %s110 = int_to_ptr.hbm [resolvable:$true] %s109
      %115 = dma.vmem_to_hbm [thread:$0]  %s108, 384, %s110, [#allocation4], 128, 128, 8
    $region25: #{linear_leaky_relu.1} parent=1 // pred_fallthru
      _
    // Predicated region
    $region26: #{linear_leaky_relu.1} parent=1 // pred_check
      _
    $region27: #{linear_leaky_relu.1} parent=1 // pred_check_branch
      %117 = sbr.rel (0) target = $region29
    $region28: #{linear_leaky_relu.1} parent=1 // pred_region
      %119 = dma.done [#allocation4], 384
    $region29: #{linear_leaky_relu.1} parent=1 // pred_fallthru
      _
    %120 = vsyncpa [#allocation3], 1
    %121 = vsyncpa [#allocation6], 1
    %122 = vsyncpa [#allocation4], 1

</llo_original>
